<compile_context>
chip_gen: v6e
topology: v6e:2x2x1
jax: 0.10.0
libtpu: 0.0.40
codegen_flags: <defaults>
</compile_context>

<pallas_src>
import math

import jax
import jax.numpy as jnp
from jax.experimental import pallas as pl
from jax.experimental.pallas import tpu as pltpu


def _round_up(n, k):
    return ((n + k - 1) // k) * k


def _vmem_cap_bytes():
    """Physical VMEM per core (conservative fallback if query unavailable)."""
    try:
        info = pltpu.get_tpu_info()
        cap = getattr(info, "vmem_capacity_bytes", None)
        if cap:
            return int(cap)
    except Exception:
        pass
    return 64 << 20  # v7x per-TC size; safe lower bound for all generations


def _vmem_bytes(tm, in_size, hidden, x_item, w_item):
    """Rough per-step VMEM working-set estimate."""
    x_block = tm * in_size * x_item           # streamed x tile
    x_t = x_block                             # in-kernel transposed copy (native dtype)
    h_t = hidden * tm * 4                     # f32 activations (H, TM)
    out = 2 * 2 * tm * 4                      # double-buffered (1,1,TM) f32 output
    weights = 2 * (hidden * in_size * w_item + 2 * hidden * 4 + 128)
    return 2 * x_block + x_t + h_t + out + weights


def _choose_tile_m(m, in_size, hidden, x_item, w_item):
    row_bytes = max(1, in_size * x_item)
    tm = (4 * 1024 * 1024) // row_bytes       # ~4 MiB streamed x block per step
    if row_bytes <= 256:                      # very narrow rows: step count dominates
        tm = 32768
    tm = min(tm, 32768)
    if m > 1024:                              # keep >= 2 row tiles so v7x uses both TCs
        tm = min(tm, _round_up(pl.cdiv(m, 2), 512))
    tm = min(tm, _round_up(m, 512))
    tm = _round_up(max(tm, 512), 512)
    # Shrink until the per-step working set fits comfortably under the VMEM target.
    while tm > 512 and _vmem_bytes(tm, in_size, hidden, x_item, w_item) > (40 << 20):
        tm = max(512, _round_up(tm // 2, 512))
    return tm


def predictor_kernel(x_ref, w1_ref, b1_ref, w2_ref, b2_ref, o_ref):
    # x_ref : (TM, IN)       input rows, native dtype (streamed)
    # w1_ref: (H, IN)        first-layer weight, PyTorch (out, in) layout, x.dtype
    # b1_ref: (H, 1)  f32
    # w2_ref: (1, H)  f32    second-layer weight as a row
    # b2_ref: (1,)    SMEM   second-layer bias (scalar)
    # o_ref : (1, 1, TM)     lane-dense logits for this row tile (f32)
    tm = x_ref.shape[0]

    x = x_ref[...]
    if x.dtype != w1_ref.dtype:               # static trace-time branch; no-op by default
        x = x.astype(w1_ref.dtype)

    # Single narrow relayout: (TM, IN) -> (IN, TM). Everything downstream is
    # already lane-dense, so no output relayout is needed.
    x_t = jnp.transpose(x)                                            # (IN, TM)

    # Layer 1 on the MXU in the input's native dtype, f32 accumulation.
    h_t = jnp.dot(w1_ref[...], x_t, preferred_element_type=jnp.float32)   # (H, TM)
    h_t = jnp.maximum(h_t + b1_ref[...], 0.0)                             # + b1, ReLU

    # TODO(synk): Dropout(p=0.1) is identity in eval mode; training-mode masking not implemented.

    # Layer 2 (H -> 1) also on the MXU: (1, H) @ (H, TM) -> lane-dense (1, TM).
    y = jnp.dot(w2_ref[...], h_t, preferred_element_type=jnp.float32)     # (1, TM)
    o_ref[...] = (y + b2_ref[0]).reshape(1, 1, tm)


def naive_predictor(x, w1, b1, w2, b2, *, mxu_dtype=None):
    """x: (..., input_size) -> (...,) logits.

    w1: (hidden, input_size)   -- PyTorch nn.Linear layout (out, in)
    b1: (hidden,)
    w2: (1, hidden) / (hidden,) / (hidden, 1)
    b2: scalar-shaped
    mxu_dtype: dtype fed to the MXU for layer 1 (default: x.dtype). Pass
      jnp.bfloat16 explicitly if you want bf16 compute with f32 inputs.
    """
    lead_shape = x.shape[:-1]
    in_size = x.shape[-1]
    hidden = w1.shape[0]

    m = math.prod(lead_shape) if lead_shape else 1
    x2d = x.reshape(m, in_size)                       # native dtype, no pad, no copy

    if mxu_dtype is None:
        mxu_dtype = x2d.dtype
    w1_mx = jnp.asarray(w1, dtype=mxu_dtype)          # one-time wrapper-side cast
    b1_col = jnp.asarray(b1, jnp.float32).reshape(hidden, 1)
    w2_row = jnp.asarray(w2, jnp.float32).reshape(1, hidden)
    b2_sc = jnp.asarray(b2, jnp.float32).reshape(1)

    x_item = x2d.dtype.itemsize
    w_item = jnp.dtype(mxu_dtype).itemsize
    tm = _choose_tile_m(m, in_size, hidden, x_item, w_item)
    num_tiles = pl.cdiv(m, tm)

    vmem_need = _vmem_bytes(tm, in_size, hidden, x_item, w_item)
    vmem_limit = int(min(max(vmem_need + (4 << 20), 32 << 20),
                         (_vmem_cap_bytes() * 3) // 4))

    cost = pl.CostEstimate(
        flops=2 * num_tiles * tm * hidden * (in_size + 1),
        transcendentals=0,
        bytes_accessed=(m * in_size * x_item
                        + w1_mx.size * w1_mx.dtype.itemsize
                        + 4 * (2 * hidden + 1)
                        + 4 * num_tiles * tm),
    )

    out = pl.pallas_call(
        predictor_kernel,
        out_shape=jax.ShapeDtypeStruct((num_tiles, 1, tm), jnp.float32),
        grid=(num_tiles,),
        in_specs=[
            pl.BlockSpec((tm, in_size), lambda i: (i, 0)),        # x: streamed row tiles
            pl.BlockSpec((hidden, in_size), lambda i: (0, 0)),    # w1: resident
            pl.BlockSpec((hidden, 1), lambda i: (0, 0)),          # b1 column: resident
            pl.BlockSpec((1, hidden), lambda i: (0, 0)),          # w2 row: resident
            pl.BlockSpec(memory_space=pltpu.MemorySpace.SMEM),    # b2 scalar
        ],
        out_specs=pl.BlockSpec((1, 1, tm), lambda i: (i, 0, 0)),  # lane-dense output row
        compiler_params=pltpu.CompilerParams(
            dimension_semantics=("parallel",),
            vmem_limit_bytes=vmem_limit,
        ),
        cost_estimate=cost,
    )(x2d, w1_mx, b1_col, w2_row, b2_sc)

    # Ragged edge rows (if m % tm != 0) hold garbage and are sliced off here.
    return out.reshape(num_tiles * tm)[:m].reshape(lead_shape)


def init_params(key, input_size, hidden_size):
    """Deterministic init mimicking nn.Linear's uniform(-1/sqrt(fan_in), +)."""
    k1, k2, k3, k4 = jax.random.split(key, 4)
    bound1 = 1.0 / jnp.sqrt(input_size)
    bound2 = 1.0 / jnp.sqrt(hidden_size)
    # PyTorch layout: (out_features, in_features)
    w1 = jax.random.uniform(k1, (hidden_size, input_size), jnp.float32, -bound1, bound1)
    b1 = jax.random.uniform(k2, (hidden_size,), jnp.float32, -bound1, bound1)
    w2 = jax.random.uniform(k3, (1, hidden_size), jnp.float32, -bound2, bound2)
    b2 = jax.random.uniform(k4, (1,), jnp.float32, -bound2, bound2)
    return w1, b1, w2, b2


if __name__ == "__main__":
    batch, seq, input_size, hidden_size = 2, 8, 32, 32

    key = jax.random.PRNGKey(0)
    kx, kp = jax.random.split(key)
    x = jax.random.normal(kx, (batch, seq, input_size), jnp.float32)
    w1, b1, w2, b2 = init_params(kp, input_size, hidden_size)

    out = naive_predictor(x, w1, b1, w2, b2)
    out = jax.block_until_ready(out)

    # pure-JAX reference check
    x2d = x.reshape(-1, input_size)
    h_ref = jnp.maximum(jnp.dot(x2d, w1.T, precision="highest") + b1, 0.0)
    ref = (jnp.dot(h_ref, w2.T, precision="highest") + b2).reshape(batch, seq)

    assert out.shape == (batch, seq)
    assert jnp.allclose(out, ref, atol=1e-4, rtol=1e-4)

    print("KERNEL_OK")
</pallas_src>

<mosaic_0001>
module attributes {stable_mosaic.version = 11 : i64} {
  func.func @predictor_kernel(%arg0: i32, %arg1: memref<512x32xf32, #tpu.memory_space<vmem>>, %arg2: memref<32x32xf32, #tpu.memory_space<vmem>>, %arg3: memref<32x1xf32, #tpu.memory_space<vmem>>, %arg4: memref<1x32xf32, #tpu.memory_space<vmem>>, %arg5: memref<1xf32, #tpu.memory_space<smem>>, %arg6: memref<1x1x512xf32, #tpu.memory_space<vmem>>) attributes {dimension_semantics = [#tpu.dimension_semantics<parallel>], iteration_bounds = array<i64: 1>, scalar_prefetch = 0 : i64, scratch_operands = 0 : i64, tpu.core_type = #tpu.core_type<tc>, window_params = [{transform_indices = @transform_0, window_bounds = array<i64: 512, 32>}, {pipeline_mode = #tpu.pipeline_mode<synchronous>, transform_indices = @transform_1, window_bounds = array<i64: 32, 32>}, {pipeline_mode = #tpu.pipeline_mode<synchronous>, transform_indices = @transform_2, window_bounds = array<i64: 32, 1>}, {pipeline_mode = #tpu.pipeline_mode<synchronous>, transform_indices = @transform_3, window_bounds = array<i64: 1, 32>}, {transform_indices = @transform_4, window_bounds = array<i64: 1>}, {transform_indices = @transform_5, window_bounds = array<i64: 1, 1, 512>}]} {
    %c0 = arith.constant 0 : index
    %c0_0 = arith.constant 0 : index
    %0 = vector.load %arg1[%c0, %c0_0] : memref<512x32xf32, #tpu.memory_space<vmem>>, vector<512x32xf32>
    %1 = tpu.transpose %0, [1, 0] : vector<512x32xf32> -> vector<32x512xf32>
    %c0_1 = arith.constant 0 : index
    %c0_2 = arith.constant 0 : index
    %2 = vector.load %arg2[%c0_1, %c0_2] : memref<32x32xf32, #tpu.memory_space<vmem>>, vector<32x32xf32>
    %cst = arith.constant dense<0.000000e+00> : vector<32x512xf32>
    %3 = tpu.matmul %2, %1, %cst {dimension_numbers = #tpu.dot_dimension_numbers<[1], [0], [0], [1], [0, 0, 1, 1], [], []>} : vector<32x32xf32>, vector<32x512xf32>, vector<32x512xf32> -> vector<32x512xf32>
    %c0_3 = arith.constant 0 : index
    %c0_4 = arith.constant 0 : index
    %4 = vector.load %arg3[%c0_3, %c0_4] : memref<32x1xf32, #tpu.memory_space<vmem>>, vector<32x1xf32>
    %5 = vector.broadcast %4 : vector<32x1xf32> to vector<32x512xf32>
    %6 = arith.addf %3, %5 : vector<32x512xf32>
    %cst_5 = arith.constant 0.000000e+00 : f32
    %7 = vector.broadcast %cst_5 : f32 to vector<32x512xf32>
    %8 = arith.maximumf %6, %7 : vector<32x512xf32>
    %c0_6 = arith.constant 0 : index
    %c0_7 = arith.constant 0 : index
    %9 = vector.load %arg4[%c0_6, %c0_7] : memref<1x32xf32, #tpu.memory_space<vmem>>, vector<1x32xf32>
    %cst_8 = arith.constant dense<0.000000e+00> : vector<1x512xf32>
    %10 = tpu.matmul %9, %8, %cst_8 {dimension_numbers = #tpu.dot_dimension_numbers<[1], [0], [0], [1], [0, 0, 1, 1], [], []>} : vector<1x32xf32>, vector<32x512xf32>, vector<1x512xf32> -> vector<1x512xf32>
    %c0_9 = arith.constant 0 : index
    %11 = memref.load %arg5[%c0_9] : memref<1xf32, #tpu.memory_space<smem>>
    %12 = vector.broadcast %11 : f32 to vector<1x512xf32>
    %13 = arith.addf %10, %12 : vector<1x512xf32>
    %14 = vector.shape_cast %13 : vector<1x512xf32> to vector<1x1x512xf32>
    %c0_10 = arith.constant 0 : index
    %c0_11 = arith.constant 0 : index
    %c0_12 = arith.constant 0 : index
    %15 = vector.load %arg6[%c0_10, %c0_11, %c0_12] : memref<1x1x512xf32, #tpu.memory_space<vmem>>, vector<1x1x512xf32>
    tpu.vector_store %arg6[%c0_10, %c0_11, %c0_12], %14 {strides = array<i32>} : memref<1x1x512xf32, #tpu.memory_space<vmem>>, vector<1x1x512xf32>,
    return
  }
  func.func @transform_0(%arg0: i32) -> (i32, i32) {
    %c0_i32 = arith.constant 0 : i32
    %c0_i32_0 = arith.constant 0 : i32
    return %arg0, %c0_i32 : i32, i32
  }
  func.func @transform_1(%arg0: i32) -> (i32, i32) {
    %c0_i32 = arith.constant 0 : i32
    %c0_i32_0 = arith.constant 0 : i32
    %c0_i32_1 = arith.constant 0 : i32
    return %c0_i32, %c0_i32_0 : i32, i32
  }
  func.func @transform_2(%arg0: i32) -> (i32, i32) {
    %c0_i32 = arith.constant 0 : i32
    %c0_i32_0 = arith.constant 0 : i32
    %c0_i32_1 = arith.constant 0 : i32
    return %c0_i32, %c0_i32_0 : i32, i32
  }
  func.func @transform_3(%arg0: i32) -> (i32, i32) {
    %c0_i32 = arith.constant 0 : i32
    %c0_i32_0 = arith.constant 0 : i32
    %c0_i32_1 = arith.constant 0 : i32
    return %c0_i32, %c0_i32_0 : i32, i32
  }
  func.func @transform_4(%arg0: i32) -> i32 {
    %c0_i32 = arith.constant 0 : i32
    %c0_i32_0 = arith.constant 0 : i32
    return %c0_i32 : i32
  }
  func.func @transform_5(%arg0: i32) -> (i32, i32, i32) {
    %c0_i32 = arith.constant 0 : i32
    %c0_i32_0 = arith.constant 0 : i32
    %c0_i32_1 = arith.constant 0 : i32
    return %arg0, %c0_i32, %c0_i32_0 : i32, i32, i32
  }
}

</mosaic_0001>

<llo_original>
// kernel: tpu_custom_call.1
$region0: #{tpu_custom_call.1}
  #allocation0 [shape = 'u32[]', space=smem, size = 0x4, offset = 0x4, fixed_abs, tag = 'smem constant byte address 0x4 - core index']
  #allocation1 [shape = 'u32[144,128]{1,0:T(1,128)}', space=vmem, size = 0x12000, scoped, tag = 'internal scratch']
  #allocation2 [shape = 'f32[1]{0:T(128)S(6)}', space=smem, size = 0x200, scoped, tag = 'scoped memory for tpu_custom_call.1']
  %s0 = inlined_call_operand.hbm [shape: f32[16,32], index: 0, kind: input, shape index: {}]
  %s1 = inlined_call_operand.vmem [shape: f32[32,32], index: 1, kind: input, shape index: {}]
  %s2 = inlined_call_operand.vmem [shape: f32[32,1], index: 2, kind: input, shape index: {}]
  %s3 = inlined_call_operand.vmem [shape: f32[1,32], index: 3, kind: input, shape index: {}]
  %s4 = inlined_call_operand.<no memory space> [shape: f32[1], index: 4, kind: input, shape index: {}]
  %s5 = inlined_call_operand.hbm [shape: f32[1,1,512], index: 5, kind: output, shape index: {}]
  %s6 = sld [smem:[#allocation0]]
  $region34: #{tpu_custom_call.1} parent=0
    _
  %s8 = ssub.s32 1, %s6
  %s9 = scalar_select 0, %s8, %s6
  %10 = sst [smem:[#allocation2]] %s4
  $region1: #{tpu_custom_call.1} parent=0
    #allocation3 [shape = 'u8[262144]{0}', space=vmem, size = 0x40000, scoped, tag = 'input window, operand 0, single buffered']
    #allocation4 [shape = 's32[1]{0}', space=sflag, size = 0x4, scoped, tag = 'scoped memory for tpu_custom_call.1']
    #allocation5 [shape = 's32[1]{0}', space=sflag, size = 0x4, scoped, tag = 'scoped memory for tpu_custom_call.1']
    #allocation6 [shape = 'u8[2048]{0}', space=vmem, size = 0x800, scoped, tag = 'output window, operand 0, single buffered']
    %11 = vsyncpa [#allocation4], 0
    %12 = vsyncpa [#allocation5], 0
    // Predicated region
    $region2: #{tpu_custom_call.1} parent=1 // pred_check
      _
    $region3: #{tpu_custom_call.1} parent=1 // pred_check_branch
      %14 = sbr.rel (0) target = $region5
    $region4: #{tpu_custom_call.1} parent=1 // pred_region
      %s16 = ssub.s32 8192, 256
      %17 = vsyncadd [#allocation4], %s16
      %s18 = sshll.u32 [#allocation3], 4
      %s19 = int_to_ptr.vmem [resolvable:$true] %s18
      %24 = dma.hbm_to_vmem [thread:$0]  %s0, 256, %s19, [#allocation4], 128, 128, 8
    $region5: #{tpu_custom_call.1} parent=1 // pred_fallthru
      _
    // Predicated region
    $region6: #{tpu_custom_call.1} parent=1 // pred_check
      _
    $region7: #{tpu_custom_call.1} parent=1 // pred_check_branch
      %26 = sbr.rel (0) target = $region9
    $region8: #{tpu_custom_call.1} parent=1 // pred_region
      _
    $region9: #{tpu_custom_call.1} parent=1 // pred_fallthru
      _
    // Predicated region
    $region10: #{tpu_custom_call.1} parent=1 // pred_check
      _
    $region11: #{tpu_custom_call.1} parent=1 // pred_check_branch
      %28 = sbr.rel (0) target = $region13
    $region12: #{tpu_custom_call.1} parent=1 // pred_region
      _
    $region13: #{tpu_custom_call.1} parent=1 // pred_fallthru
      _
    // Predicated region
    $region14: #{tpu_custom_call.1} parent=1 // pred_check
      _
    $region15: #{tpu_custom_call.1} parent=1 // pred_check_branch
      %30 = sbr.rel (0) target = $region17
    $region16: #{tpu_custom_call.1} parent=1 // pred_region
      _
    $region17: #{tpu_custom_call.1} parent=1 // pred_fallthru
      _
    // Predicated region
    $region18: #{tpu_custom_call.1} parent=1 // pred_check
      _
    $region19: #{tpu_custom_call.1} parent=1 // pred_check_branch
      %32 = sbr.rel (0) target = $region21
    $region20: #{tpu_custom_call.1} parent=1 // pred_region
      _
    $region21: #{tpu_custom_call.1} parent=1 // pred_fallthru
      _
    // Predicated region
    $region22: #{tpu_custom_call.1} parent=1 // pred_check
      _
    $region23: #{tpu_custom_call.1} parent=1 // pred_check_branch
      %34 = sbr.rel (0) target = $region25
    $region24: #{tpu_custom_call.1} parent=1 // pred_region
      %35 = dma.done [#allocation4], 8192
    $region25: #{tpu_custom_call.1} parent=1 // pred_fallthru
      _
    %v36 = vld [vmem:[#allocation3] sm:$0xff]
    %v37 = vld [vmem:[#allocation3 + $0x8] sm:$0xff]
    %v38 = vld [vmem:[#allocation3 + $0x10] sm:$0xff]
    %v39 = vld [vmem:[#allocation3 + $0x18] sm:$0xff]
    %v40 = vld [vmem:[#allocation3 + $0x20] sm:$0xff]
    %v41 = vld [vmem:[#allocation3 + $0x28] sm:$0xff]
    %v42 = vld [vmem:[#allocation3 + $0x30] sm:$0xff]
    %v43 = vld [vmem:[#allocation3 + $0x38] sm:$0xff]
    %v44 = vld [vmem:[#allocation3 + $0x40] sm:$0xff]
    %v45 = vld [vmem:[#allocation3 + $0x48] sm:$0xff]
    %v46 = vld [vmem:[#allocation3 + $0x50] sm:$0xff]
    %v47 = vld [vmem:[#allocation3 + $0x58] sm:$0xff]
    %v48 = vld [vmem:[#allocation3 + $0x60] sm:$0xff]
    %v49 = vld [vmem:[#allocation3 + $0x68] sm:$0xff]
    %v50 = vld [vmem:[#allocation3 + $0x70] sm:$0xff]
    %v51 = vld [vmem:[#allocation3 + $0x78] sm:$0xff]
    %v52 = vld [vmem:[#allocation3 + $0x80] sm:$0xff]
    %v53 = vld [vmem:[#allocation3 + $0x88] sm:$0xff]
    %v54 = vld [vmem:[#allocation3 + $0x90] sm:$0xff]
    %v55 = vld [vmem:[#allocation3 + $0x98] sm:$0xff]
    %v56 = vld [vmem:[#allocation3 + $0xa0] sm:$0xff]
    %v57 = vld [vmem:[#allocation3 + $0xa8] sm:$0xff]
    %v58 = vld [vmem:[#allocation3 + $0xb0] sm:$0xff]
    %v59 = vld [vmem:[#allocation3 + $0xb8] sm:$0xff]
    %v60 = vld [vmem:[#allocation3 + $0xc0] sm:$0xff]
    %v61 = vld [vmem:[#allocation3 + $0xc8] sm:$0xff]
    %v62 = vld [vmem:[#allocation3 + $0xd0] sm:$0xff]
    %v63 = vld [vmem:[#allocation3 + $0xd8] sm:$0xff]
    %v64 = vld [vmem:[#allocation3 + $0xe0] sm:$0xff]
    %v65 = vld [vmem:[#allocation3 + $0xe8] sm:$0xff]
    %v66 = vld [vmem:[#allocation3 + $0xf0] sm:$0xff]
    %v67 = vld [vmem:[#allocation3 + $0xf8] sm:$0xff]
    %v68 = vld [vmem:[#allocation3 + $0x100] sm:$0xff]
    %v69 = vld [vmem:[#allocation3 + $0x108] sm:$0xff]
    %v70 = vld [vmem:[#allocation3 + $0x110] sm:$0xff]
    %v71 = vld [vmem:[#allocation3 + $0x118] sm:$0xff]
    %v72 = vld [vmem:[#allocation3 + $0x120] sm:$0xff]
    %v73 = vld [vmem:[#allocation3 + $0x128] sm:$0xff]
    %v74 = vld [vmem:[#allocation3 + $0x130] sm:$0xff]
    %v75 = vld [vmem:[#allocation3 + $0x138] sm:$0xff]
    %v76 = vld [vmem:[#allocation3 + $0x140] sm:$0xff]
    %v77 = vld [vmem:[#allocation3 + $0x148] sm:$0xff]
    %v78 = vld [vmem:[#allocation3 + $0x150] sm:$0xff]
    %v79 = vld [vmem:[#allocation3 + $0x158] sm:$0xff]
    %v80 = vld [vmem:[#allocation3 + $0x160] sm:$0xff]
    %v81 = vld [vmem:[#allocation3 + $0x168] sm:$0xff]
    %v82 = vld [vmem:[#allocation3 + $0x170] sm:$0xff]
    %v83 = vld [vmem:[#allocation3 + $0x178] sm:$0xff]
    %v84 = vld [vmem:[#allocation3 + $0x180] sm:$0xff]
    %v85 = vld [vmem:[#allocation3 + $0x188] sm:$0xff]
    %v86 = vld [vmem:[#allocation3 + $0x190] sm:$0xff]
    %v87 = vld [vmem:[#allocation3 + $0x198] sm:$0xff]
    %v88 = vld [vmem:[#allocation3 + $0x1a0] sm:$0xff]
    %v89 = vld [vmem:[#allocation3 + $0x1a8] sm:$0xff]
    %v90 = vld [vmem:[#allocation3 + $0x1b0] sm:$0xff]
    %v91 = vld [vmem:[#allocation3 + $0x1b8] sm:$0xff]
    %v92 = vld [vmem:[#allocation3 + $0x1c0] sm:$0xff]
    %v93 = vld [vmem:[#allocation3 + $0x1c8] sm:$0xff]
    %v94 = vld [vmem:[#allocation3 + $0x1d0] sm:$0xff]
    %v95 = vld [vmem:[#allocation3 + $0x1d8] sm:$0xff]
    %v96 = vld [vmem:[#allocation3 + $0x1e0] sm:$0xff]
    %v97 = vld [vmem:[#allocation3 + $0x1e8] sm:$0xff]
    %v98 = vld [vmem:[#allocation3 + $0x1f0] sm:$0xff]
    %v99 = vld [vmem:[#allocation3 + $0x1f8] sm:$0xff]
    %v100 = vld [vmem:[%s1] sm:$0xff]
    %v101 = vld [vmem:[%s1 + $0x8] sm:$0xff]
    %v102 = vld [vmem:[%s1 + $0x10] sm:$0xff]
    %v103 = vld [vmem:[%s1 + $0x18] sm:$0xff]
    %v104 = vld [vmem:[%s2] sm:$0xff]
    %v105 = vld [vmem:[%s2 + $0x8] sm:$0xff]
    %v106 = vld [vmem:[%s2 + $0x10] sm:$0xff]
    %v107 = vld [vmem:[%s2 + $0x18] sm:$0xff]
    %109 = vset.pattern.permute.xlu0 0
    %110 = vperm.xlu0 %109, %v104
    %v111 = vpop.permute.xlu0 %110
    %114 = vset.pattern.permute.xlu0 0
    %115 = vperm.xlu0 %114, %v105
    %v116 = vpop.permute.xlu0 %115
    %119 = vset.pattern.permute.xlu0 0
    %120 = vperm.xlu0 %119, %v106
    %v121 = vpop.permute.xlu0 %120
    %124 = vset.pattern.permute.xlu0 0
    %125 = vperm.xlu0 %124, %v107
    %v126 = vpop.permute.xlu0 %125
    %vm128 = vcmask 261120
    %v130 = vsel %vm128, %v100, 0
    %v133 = vsel %vm128, %v101, 0
    %v136 = vsel %vm128, %v102, 0
    %v139 = vsel %vm128, %v103, 0
    %v142 = vsel %vm128, %v36, 0
    %v145 = vsel %vm128, %v37, 0
    %v148 = vsel %vm128, %v38, 0
    %v151 = vsel %vm128, %v39, 0
    %v154 = vsel %vm128, %v40, 0
    %v157 = vsel %vm128, %v41, 0
    %v160 = vsel %vm128, %v42, 0
    %v163 = vsel %vm128, %v43, 0
    %v166 = vsel %vm128, %v44, 0
    %v169 = vsel %vm128, %v45, 0
    %v172 = vsel %vm128, %v46, 0
    %v175 = vsel %vm128, %v47, 0
    %v178 = vsel %vm128, %v48, 0
    %v181 = vsel %vm128, %v49, 0
    %v184 = vsel %vm128, %v50, 0
    %v187 = vsel %vm128, %v51, 0
    %v190 = vsel %vm128, %v52, 0
    %v193 = vsel %vm128, %v53, 0
    %v196 = vsel %vm128, %v54, 0
    %v199 = vsel %vm128, %v55, 0
    %v202 = vsel %vm128, %v56, 0
    %v205 = vsel %vm128, %v57, 0
    %v208 = vsel %vm128, %v58, 0
    %v211 = vsel %vm128, %v59, 0
    %v214 = vsel %vm128, %v60, 0
    %v217 = vsel %vm128, %v61, 0
    %v220 = vsel %vm128, %v62, 0
    %v223 = vsel %vm128, %v63, 0
    %v226 = vsel %vm128, %v64, 0
    %v229 = vsel %vm128, %v65, 0
    %v232 = vsel %vm128, %v66, 0
    %v235 = vsel %vm128, %v67, 0
    %v238 = vsel %vm128, %v68, 0
    %v241 = vsel %vm128, %v69, 0
    %v244 = vsel %vm128, %v70, 0
    %v247 = vsel %vm128, %v71, 0
    %v250 = vsel %vm128, %v72, 0
    %v253 = vsel %vm128, %v73, 0
    %v256 = vsel %vm128, %v74, 0
    %v259 = vsel %vm128, %v75, 0
    %v262 = vsel %vm128, %v76, 0
    %v265 = vsel %vm128, %v77, 0
    %v268 = vsel %vm128, %v78, 0
    %v271 = vsel %vm128, %v79, 0
    %v274 = vsel %vm128, %v80, 0
    %v277 = vsel %vm128, %v81, 0
    %v280 = vsel %vm128, %v82, 0
    %v283 = vsel %vm128, %v83, 0
    %v286 = vsel %vm128, %v84, 0
    %v289 = vsel %vm128, %v85, 0
    %v292 = vsel %vm128, %v86, 0
    %v295 = vsel %vm128, %v87, 0
    %v298 = vsel %vm128, %v88, 0
    %v301 = vsel %vm128, %v89, 0
    %v304 = vsel %vm128, %v90, 0
    %v307 = vsel %vm128, %v91, 0
    %v310 = vsel %vm128, %v92, 0
    %v313 = vsel %vm128, %v93, 0
    %v316 = vsel %vm128, %v94, 0
    %v319 = vsel %vm128, %v95, 0
    %v322 = vsel %vm128, %v96, 0
    %v325 = vsel %vm128, %v97, 0
    %v328 = vsel %vm128, %v98, 0
    %v331 = vsel %vm128, %v99, 0
    %333 = vmatprep.subr.mxu0 0.0
    %334 = vmatpush1.xpose.msra.mxu0 %v187
    %335 = vmatprep.subr.mxu0 0.0
    %336 = vmatpush1.xpose.msra.mxu0 %v184
    %337 = vmatprep.subr.mxu0 0.0
    %338 = vmatpush1.xpose.msra.mxu0 %v181
    %339 = vmatprep.subr.mxu0 0.0
    %340 = vmatpush1.xpose.msra.mxu0 %v178
    %341 = vmatprep.subr.mxu0 0.0
    %342 = vmatpush1.xpose.msra.mxu0 %v175
    %343 = vmatprep.subr.mxu0 0.0
    %344 = vmatpush1.xpose.msra.mxu0 %v172
    %345 = vmatprep.subr.mxu0 0.0
    %346 = vmatpush1.xpose.msra.mxu0 %v169
    %347 = vmatprep.subr.mxu0 0.0
    %348 = vmatpush1.xpose.msra.mxu0 %v166
    %349 = vmatprep.subr.mxu0 0.0
    %350 = vmatpush1.xpose.msra.mxu0 %v163
    %351 = vmatprep.subr.mxu0 0.0
    %352 = vmatpush1.xpose.msra.mxu0 %v160
    %353 = vmatprep.subr.mxu0 0.0
    %354 = vmatpush1.xpose.msra.mxu0 %v157
    %355 = vmatprep.subr.mxu0 0.0
    %356 = vmatpush1.xpose.msra.mxu0 %v154
    %357 = vmatprep.subr.mxu0 0.0
    %358 = vmatpush1.xpose.msra.mxu0 %v151
    %359 = vmatprep.subr.mxu0 0.0
    %360 = vmatpush1.xpose.msra.mxu0 %v148
    %361 = vmatprep.subr.mxu0 0.0
    %362 = vmatpush1.xpose.msra.mxu0 %v145
    %363 = vmatprep.subr.mxu0 0.0
    %364 = vmatpush1.xpose.msra.mxu0 %v142
    %365 = vmatprep.subr.mxu0 0.0
    %366 = vmatpush2.xpose.msra.mxu0 %v235
    %367 = vmatprep.subr.mxu0 0.0
    %368 = vmatpush2.xpose.msra.mxu0 %v232
    %369 = vmatprep.subr.mxu0 0.0
    %370 = vmatpush2.xpose.msra.mxu0 %v229
    %371 = vmatprep.subr.mxu0 0.0
    %372 = vmatpush2.xpose.msra.mxu0 %v226
    %373 = vmatprep.subr.mxu0 0.0
    %374 = vmatpush2.xpose.msra.mxu0 %v223
    %375 = vmatprep.subr.mxu0 0.0
    %376 = vmatpush2.xpose.msra.mxu0 %v220
    %377 = vmatprep.subr.mxu0 0.0
    %378 = vmatpush2.xpose.msra.mxu0 %v217
    %379 = vmatprep.subr.mxu0 0.0
    %380 = vmatpush2.xpose.msra.mxu0 %v214
    %381 = vmatprep.subr.mxu0 0.0
    %382 = vmatpush2.xpose.msra.mxu0 %v211
    %383 = vmatprep.subr.mxu0 0.0
    %384 = vmatpush2.xpose.msra.mxu0 %v208
    %385 = vmatprep.subr.mxu0 0.0
    %386 = vmatpush2.xpose.msra.mxu0 %v205
    %387 = vmatprep.subr.mxu0 0.0
    %388 = vmatpush2.xpose.msra.mxu0 %v202
    %389 = vmatprep.subr.mxu0 0.0
    %390 = vmatpush2.xpose.msra.mxu0 %v199
    %391 = vmatprep.subr.mxu0 0.0
    %392 = vmatpush2.xpose.msra.mxu0 %v196
    %393 = vmatprep.subr.mxu0 0.0
    %394 = vmatpush2.xpose.msra.mxu0 %v193
    %395 = vmatprep.subr.mxu0 0.0
    %396 = vmatpush2.xpose.msra.mxu0 %v190
    %397 = vmatprep.mubr.f32.mxu0 0.0
    %398 = vmatmul.mubr.f32.gmra.mxu0 %v130
    %v399 = vpop.f32.mrf.mxu0
    %v400 = vadd.f32 %v111, %v399
    %v401 = vpop.f32.mrf.mxu0
    %v402 = vadd.f32 %v111, %v401
    %403 = vmatprep.mubr.f32.mxu0 0.0
    %404 = vmatmul.mubr.f32.gmra.mxu0 %v133
    %v405 = vpop.f32.mrf.mxu0
    %v406 = vadd.f32 %v116, %v405
    %v407 = vpop.f32.mrf.mxu0
    %v408 = vadd.f32 %v116, %v407
    %409 = vmatprep.mubr.f32.mxu0 0.0
    %410 = vmatmul.mubr.f32.gmra.mxu0 %v136
    %v411 = vpop.f32.mrf.mxu0
    %v412 = vadd.f32 %v121, %v411
    %v413 = vpop.f32.mrf.mxu0
    %v414 = vadd.f32 %v121, %v413
    %415 = vmatprep.mubr.f32.mxu0 0.0
    %416 = vmatmul.mubr.f32.gmra.mxu0 %v139
    %v417 = vpop.f32.mrf.mxu0
    %v418 = vadd.f32 %v126, %v417
    %v419 = vpop.f32.mrf.mxu0
    %v420 = vadd.f32 %v126, %v419
    %421 = vdwg.mxu0
    %422 = vmatprep.subr.mxu0 0.0
    %423 = vmatpush1.xpose.msra.mxu0 %v283
    %424 = vmatprep.subr.mxu0 0.0
    %425 = vmatpush1.xpose.msra.mxu0 %v280
    %426 = vmatprep.subr.mxu0 0.0
    %427 = vmatpush1.xpose.msra.mxu0 %v277
    %428 = vmatprep.subr.mxu0 0.0
    %429 = vmatpush1.xpose.msra.mxu0 %v274
    %430 = vmatprep.subr.mxu0 0.0
    %431 = vmatpush1.xpose.msra.mxu0 %v271
    %432 = vmatprep.subr.mxu0 0.0
    %433 = vmatpush1.xpose.msra.mxu0 %v268
    %434 = vmatprep.subr.mxu0 0.0
    %435 = vmatpush1.xpose.msra.mxu0 %v265
    %436 = vmatprep.subr.mxu0 0.0
    %437 = vmatpush1.xpose.msra.mxu0 %v262
    %438 = vmatprep.subr.mxu0 0.0
    %439 = vmatpush1.xpose.msra.mxu0 %v259
    %440 = vmatprep.subr.mxu0 0.0
    %441 = vmatpush1.xpose.msra.mxu0 %v256
    %442 = vmatprep.subr.mxu0 0.0
    %443 = vmatpush1.xpose.msra.mxu0 %v253
    %444 = vmatprep.subr.mxu0 0.0
    %445 = vmatpush1.xpose.msra.mxu0 %v250
    %446 = vmatprep.subr.mxu0 0.0
    %447 = vmatpush1.xpose.msra.mxu0 %v247
    %448 = vmatprep.subr.mxu0 0.0
    %449 = vmatpush1.xpose.msra.mxu0 %v244
    %450 = vmatprep.subr.mxu0 0.0
    %451 = vmatpush1.xpose.msra.mxu0 %v241
    %452 = vmatprep.subr.mxu0 0.0
    %453 = vmatpush1.xpose.msra.mxu0 %v238
    %454 = vmatprep.subr.mxu0 0.0
    %455 = vmatpush2.xpose.msra.mxu0 %v331
    %456 = vmatprep.subr.mxu0 0.0
    %457 = vmatpush2.xpose.msra.mxu0 %v328
    %458 = vmatprep.subr.mxu0 0.0
    %459 = vmatpush2.xpose.msra.mxu0 %v325
    %460 = vmatprep.subr.mxu0 0.0
    %461 = vmatpush2.xpose.msra.mxu0 %v322
    %462 = vmatprep.subr.mxu0 0.0
    %463 = vmatpush2.xpose.msra.mxu0 %v319
    %464 = vmatprep.subr.mxu0 0.0
    %465 = vmatpush2.xpose.msra.mxu0 %v316
    %466 = vmatprep.subr.mxu0 0.0
    %467 = vmatpush2.xpose.msra.mxu0 %v313
    %468 = vmatprep.subr.mxu0 0.0
    %469 = vmatpush2.xpose.msra.mxu0 %v310
    %470 = vmatprep.subr.mxu0 0.0
    %471 = vmatpush2.xpose.msra.mxu0 %v307
    %472 = vmatprep.subr.mxu0 0.0
    %473 = vmatpush2.xpose.msra.mxu0 %v304
    %474 = vmatprep.subr.mxu0 0.0
    %475 = vmatpush2.xpose.msra.mxu0 %v301
    %476 = vmatprep.subr.mxu0 0.0
    %477 = vmatpush2.xpose.msra.mxu0 %v298
    %478 = vmatprep.subr.mxu0 0.0
    %479 = vmatpush2.xpose.msra.mxu0 %v295
    %480 = vmatprep.subr.mxu0 0.0
    %481 = vmatpush2.xpose.msra.mxu0 %v292
    %482 = vmatprep.subr.mxu0 0.0
    %483 = vmatpush2.xpose.msra.mxu0 %v289
    %484 = vmatprep.subr.mxu0 0.0
    %485 = vmatpush2.xpose.msra.mxu0 %v286
    %486 = vmatprep.mubr.f32.mxu0 0.0
    %487 = vmatmul.mubr.f32.gmra.mxu0 %v130
    %v488 = vpop.f32.mrf.mxu0
    %v489 = vadd.f32 %v111, %v488
    %v490 = vpop.f32.mrf.mxu0
    %v491 = vadd.f32 %v111, %v490
    %492 = vmatprep.mubr.f32.mxu0 0.0
    %493 = vmatmul.mubr.f32.gmra.mxu0 %v133
    %v494 = vpop.f32.mrf.mxu0
    %v495 = vadd.f32 %v116, %v494
    %v496 = vpop.f32.mrf.mxu0
    %v497 = vadd.f32 %v116, %v496
    %498 = vmatprep.mubr.f32.mxu0 0.0
    %499 = vmatmul.mubr.f32.gmra.mxu0 %v136
    %v500 = vpop.f32.mrf.mxu0
    %v501 = vadd.f32 %v121, %v500
    %v502 = vpop.f32.mrf.mxu0
    %v503 = vadd.f32 %v121, %v502
    %504 = vmatprep.mubr.f32.mxu0 0.0
    %505 = vmatmul.mubr.f32.gmra.mxu0 %v139
    %v506 = vpop.f32.mrf.mxu0
    %v507 = vadd.f32 %v126, %v506
    %v508 = vpop.f32.mrf.mxu0
    %v509 = vadd.f32 %v126, %v508
    %510 = vdwg.mxu0
    %v511 = vmax.f32 %v400, 0.0
    %v512 = vmax.f32 %v402, 0.0
    %v513 = vmax.f32 %v489, 0.0
    %v514 = vmax.f32 %v491, 0.0
    %v515 = vmax.f32 %v406, 0.0
    %v516 = vmax.f32 %v408, 0.0
    %v517 = vmax.f32 %v495, 0.0
    %v518 = vmax.f32 %v497, 0.0
    %v519 = vmax.f32 %v412, 0.0
    %v520 = vmax.f32 %v414, 0.0
    %v521 = vmax.f32 %v501, 0.0
    %v522 = vmax.f32 %v503, 0.0
    %v523 = vmax.f32 %v418, 0.0
    %v524 = vmax.f32 %v420, 0.0
    %v525 = vmax.f32 %v507, 0.0
    %v526 = vmax.f32 %v509, 0.0
    %v527 = vld [vmem:[%s3] sm:$0x1]
    %s528 = sld [smem:[#allocation2]]
    %v529 = vstv %s528
    %v531 = vsel %vm128, %v527, 0
    %533 = vmatprep.subr.mxu0 0.0
    %534 = vmatpush1.msra.mxu0 0.0
    %535 = vmatprep.subr.mxu0 0.0
    %536 = vmatpush1.msra.mxu0 0.0
    %537 = vmatprep.subr.mxu0 0.0
    %538 = vmatpush1.msra.mxu0 0.0
    %539 = vmatprep.subr.mxu0 0.0
    %540 = vmatpush1.msra.mxu0 0.0
    %541 = vmatprep.subr.mxu0 0.0
    %542 = vmatpush1.msra.mxu0 0.0
    %543 = vmatprep.subr.mxu0 0.0
    %544 = vmatpush1.msra.mxu0 0.0
    %545 = vmatprep.subr.mxu0 0.0
    %546 = vmatpush1.msra.mxu0 0.0
    %547 = vmatprep.subr.mxu0 0.0
    %548 = vmatpush1.msra.mxu0 0.0
    %549 = vmatprep.subr.mxu0 0.0
    %550 = vmatpush1.msra.mxu0 0.0
    %551 = vmatprep.subr.mxu0 0.0
    %552 = vmatpush1.msra.mxu0 0.0
    %553 = vmatprep.subr.mxu0 0.0
    %554 = vmatpush1.msra.mxu0 0.0
    %555 = vmatprep.subr.mxu0 0.0
    %556 = vmatpush1.msra.mxu0 0.0
    %557 = vmatprep.subr.mxu0 %v524
    %558 = vmatpush1.msra.mxu0 %v523
    %559 = vmatprep.subr.mxu0 %v520
    %560 = vmatpush1.msra.mxu0 %v519
    %561 = vmatprep.subr.mxu0 %v516
    %562 = vmatpush1.msra.mxu0 %v515
    %563 = vmatprep.subr.mxu0 %v512
    %564 = vmatpush1.msra.mxu0 %v511
    %565 = vmatprep.subr.mxu0 0.0
    %566 = vmatpush2.msra.mxu0 0.0
    %567 = vmatprep.subr.mxu0 0.0
    %568 = vmatpush2.msra.mxu0 0.0
    %569 = vmatprep.subr.mxu0 0.0
    %570 = vmatpush2.msra.mxu0 0.0
    %571 = vmatprep.subr.mxu0 0.0
    %572 = vmatpush2.msra.mxu0 0.0
    %573 = vmatprep.subr.mxu0 0.0
    %574 = vmatpush2.msra.mxu0 0.0
    %575 = vmatprep.subr.mxu0 0.0
    %576 = vmatpush2.msra.mxu0 0.0
    %577 = vmatprep.subr.mxu0 0.0
    %578 = vmatpush2.msra.mxu0 0.0
    %579 = vmatprep.subr.mxu0 0.0
    %580 = vmatpush2.msra.mxu0 0.0
    %581 = vmatprep.subr.mxu0 0.0
    %582 = vmatpush2.msra.mxu0 0.0
    %583 = vmatprep.subr.mxu0 0.0
    %584 = vmatpush2.msra.mxu0 0.0
    %585 = vmatprep.subr.mxu0 0.0
    %586 = vmatpush2.msra.mxu0 0.0
    %587 = vmatprep.subr.mxu0 0.0
    %588 = vmatpush2.msra.mxu0 0.0
    %589 = vmatprep.subr.mxu0 0.0
    %590 = vmatpush2.msra.mxu0 0.0
    %591 = vmatprep.subr.mxu0 0.0
    %592 = vmatpush2.msra.mxu0 0.0
    %593 = vmatprep.subr.mxu0 0.0
    %594 = vmatpush2.msra.mxu0 0.0
    %595 = vmatprep.subr.mxu0 0.0
    %596 = vmatpush2.msra.mxu0 0.0
    %597 = vmatprep.mubr.f32.mxu0 0.0
    %598 = vmatmul.mubr.f32.gmra.mxu0 %v531
    %v599 = vpop.f32.mrf.mxu0
    %v600 = vadd.f32 %v529, %v599
    %v601 = vpop.f32.mrf.mxu0
    %v602 = vadd.f32 %v529, %v601
    %603 = vdwg.mxu0
    %604 = vmatprep.subr.mxu0 0.0
    %605 = vmatpush1.msra.mxu0 0.0
    %606 = vmatprep.subr.mxu0 0.0
    %607 = vmatpush1.msra.mxu0 0.0
    %608 = vmatprep.subr.mxu0 0.0
    %609 = vmatpush1.msra.mxu0 0.0
    %610 = vmatprep.subr.mxu0 0.0
    %611 = vmatpush1.msra.mxu0 0.0
    %612 = vmatprep.subr.mxu0 0.0
    %613 = vmatpush1.msra.mxu0 0.0
    %614 = vmatprep.subr.mxu0 0.0
    %615 = vmatpush1.msra.mxu0 0.0
    %616 = vmatprep.subr.mxu0 0.0
    %617 = vmatpush1.msra.mxu0 0.0
    %618 = vmatprep.subr.mxu0 0.0
    %619 = vmatpush1.msra.mxu0 0.0
    %620 = vmatprep.subr.mxu0 0.0
    %621 = vmatpush1.msra.mxu0 0.0
    %622 = vmatprep.subr.mxu0 0.0
    %623 = vmatpush1.msra.mxu0 0.0
    %624 = vmatprep.subr.mxu0 0.0
    %625 = vmatpush1.msra.mxu0 0.0
    %626 = vmatprep.subr.mxu0 0.0
    %627 = vmatpush1.msra.mxu0 0.0
    %628 = vmatprep.subr.mxu0 %v526
    %629 = vmatpush1.msra.mxu0 %v525
    %630 = vmatprep.subr.mxu0 %v522
    %631 = vmatpush1.msra.mxu0 %v521
    %632 = vmatprep.subr.mxu0 %v518
    %633 = vmatpush1.msra.mxu0 %v517
    %634 = vmatprep.subr.mxu0 %v514
    %635 = vmatpush1.msra.mxu0 %v513
    %636 = vmatprep.subr.mxu0 0.0
    %637 = vmatpush2.msra.mxu0 0.0
    %638 = vmatprep.subr.mxu0 0.0
    %639 = vmatpush2.msra.mxu0 0.0
    %640 = vmatprep.subr.mxu0 0.0
    %641 = vmatpush2.msra.mxu0 0.0
    %642 = vmatprep.subr.mxu0 0.0
    %643 = vmatpush2.msra.mxu0 0.0
    %644 = vmatprep.subr.mxu0 0.0
    %645 = vmatpush2.msra.mxu0 0.0
    %646 = vmatprep.subr.mxu0 0.0
    %647 = vmatpush2.msra.mxu0 0.0
    %648 = vmatprep.subr.mxu0 0.0
    %649 = vmatpush2.msra.mxu0 0.0
    %650 = vmatprep.subr.mxu0 0.0
    %651 = vmatpush2.msra.mxu0 0.0
    %652 = vmatprep.subr.mxu0 0.0
    %653 = vmatpush2.msra.mxu0 0.0
    %654 = vmatprep.subr.mxu0 0.0
    %655 = vmatpush2.msra.mxu0 0.0
    %656 = vmatprep.subr.mxu0 0.0
    %657 = vmatpush2.msra.mxu0 0.0
    %658 = vmatprep.subr.mxu0 0.0
    %659 = vmatpush2.msra.mxu0 0.0
    %660 = vmatprep.subr.mxu0 0.0
    %661 = vmatpush2.msra.mxu0 0.0
    %662 = vmatprep.subr.mxu0 0.0
    %663 = vmatpush2.msra.mxu0 0.0
    %664 = vmatprep.subr.mxu0 0.0
    %665 = vmatpush2.msra.mxu0 0.0
    %666 = vmatprep.subr.mxu0 0.0
    %667 = vmatpush2.msra.mxu0 0.0
    %668 = vmatprep.mubr.f32.mxu0 0.0
    %669 = vmatmul.mubr.f32.gmra.mxu0 %v531
    %v670 = vpop.f32.mrf.mxu0
    %v671 = vadd.f32 %v529, %v670
    %v672 = vpop.f32.mrf.mxu0
    %v673 = vadd.f32 %v529, %v672
    %674 = vdwg.mxu0
    %v679 = vcombine.low %v600, %v602
    %v680 = vcombine.low %v671, %v673
    %v682 = vunpack.c.l.s4 1966171168
    %v683 = vunpack.c.0.s8 %v682
    %v684 = vlaneseq
    %v685 = vshrl.u32 %v684, 7
    %v686 = vsub.s32 %v683, %v685
    %v687 = vrot.slane %v679, %v686
    %v689 = vunpack.c.l.s4 1966171168
    %v690 = vunpack.c.0.s8 %v689
    %v691 = vlaneseq
    %v692 = vshrl.u32 %v691, 7
    %v693 = vsub.s32 %v690, %v692
    %v694 = vrot.slane %v680, %v693
    %v695 = vcombine.low %v687, %v694
    %v697 = vunpack.c.l.s4 1966171168
    %v698 = vunpack.c.0.s8 %v697
    %v699 = vlaneseq
    %v700 = vshrl.u32 %v699, 7
    %v701 = vsub.s32 %v698, %v700
    %v702 = vrot.slane %v695, %v701
    %v704 = vlaneseq
    %vm705 = vcmp.ge.s32.totalorder %v704, 0
    %vm706 = vcmp.lt.s32.totalorder %v704, 512
    %vm707 = vmand %vm705, %vm706
    %708 = vst.msk [vmem:[#allocation6] sm:$0xf] %vm707, %v702
    // Predicated region
    $region26: #{tpu_custom_call.1} parent=1 // pred_check
      _
    $region27: #{tpu_custom_call.1} parent=1 // pred_check_branch
      %710 = sbr.rel (0) target = $region29
    $region28: #{tpu_custom_call.1} parent=1 // pred_region
      %s712 = ssub.s32 64, 64
      %713 = vsyncadd [#allocation5], %s712
      %s715 = sshll.u32 [#allocation6], 4
      %s716 = int_to_ptr.vmem [resolvable:$true] %s715
      %718 = dma.vmem_to_hbm [thread:$0]  %s716, 64, %s5, [#allocation5]
    $region29: #{tpu_custom_call.1} parent=1 // pred_fallthru
      _
    // Predicated region
    $region30: #{tpu_custom_call.1} parent=1 // pred_check
      _
    $region31: #{tpu_custom_call.1} parent=1 // pred_check_branch
      %720 = sbr.rel (0) target = $region33
    $region32: #{tpu_custom_call.1} parent=1 // pred_region
      %721 = dma.done [#allocation5], 64
    $region33: #{tpu_custom_call.1} parent=1 // pred_fallthru
      _
    %722 = vsyncpa [#allocation4], 1
    %723 = vsyncpa [#allocation5], 1

</llo_original>
